<compile_context>
chip_gen: v7x
topology: tpu7x:2x2x1
jax: 0.10.0
libtpu: 0.0.40
codegen_flags: <defaults>
</compile_context>

<pallas_src>
import numpy as np
import jax
import jax.numpy as jnp
from jax import lax
from jax.experimental import pallas as pl
from jax.experimental.pallas import tpu as pltpu

SMOOTH_L1_BETA = 1.25
_HALF_OVER_BETA = 0.5 / SMOOTH_L1_BETA      # 0.4 : avoids a per-element divide
# The quadratic smooth-L1 branch is always taken because |softmax - onehot| <= 1
# and SMOOTH_L1_BETA > 1.  Guard the branch elimination.
assert SMOOTH_L1_BETA > 1.0


def _make_cb_loss_kernel(batch_size, num_classes):
    """Builds the kernel closed over the static batch size / class count."""
    B = int(batch_size)
    C = int(num_classes)

    def kernel(preds_ref, truth_ref, cw_ref, out_ref):
        # preds_ref: (TB, C)  natural layout block (last tile may overhang B)
        # truth_ref: (1, TB)  int32 labels, lane-dense (last tile may overhang)
        # cw_ref:    (C, 1)   f32 class-balanced weights
        # out_ref:   (1, 1)   f32 SMEM partial sum for this tile
        TB = preds_ref.shape[0]
        base = pl.program_id(0) * TB

        # Validity of each sample lane: handles the ragged final tile without
        # any wrapper-side padding (out-of-bounds reads are garbage).
        lane = lax.broadcasted_iota(jnp.int32, (1, TB), 1)
        valid = (base + lane) < B                                     # (1, TB)

        # ---- (TB, C) -> (C, TB) transpose on the otherwise-idle MXU --------
        # out[c, b] = sum_k eye[c, k] * preds[b, k] = preds[b, c]
        # Exact: identity weights, f32 accumulation, highest precision.
        eye = (lax.broadcasted_iota(jnp.int32, (C, C), 0) ==
               lax.broadcasted_iota(jnp.int32, (C, C), 1)
               ).astype(preds_ref.dtype)
        preds_t = lax.dot_general(
            eye, preds_ref[...],
            dimension_numbers=(((1,), (1,)), ((), ())),
            preferred_element_type=jnp.float32,
            precision=lax.Precision.HIGHEST)                          # (C, TB)

        # Sanitize overhang lanes BEFORE exp (garbage could be inf/NaN).
        x = jnp.where(valid, preds_t, 0.0)                            # (C, TB)

        # ---- softmax over classes (sublane axis), lane-dense ----------------
        m = jnp.max(x, axis=0, keepdims=True)                         # (1, TB)
        e = jnp.exp(x - m)
        p = e * pl.reciprocal(jnp.sum(e, axis=0, keepdims=True), approx=False)

        # ---- one-hot as a boolean mask; per-sample class-balanced weight ----
        truth = jnp.where(valid, truth_ref[...], -1)                  # (1, TB)
        cls = lax.broadcasted_iota(jnp.int32, (C, 1), 0)              # (C, 1)
        mask = cls == truth                                           # (C, TB)
        w = jnp.sum(jnp.where(mask, cw_ref[...], 0.0),
                    axis=0, keepdims=True)                            # (1, TB)

        # ---- smooth-L1: quadratic branch only (|d| <= 1 < beta) -------------
        d = jnp.where(mask, p - 1.0, p)
        l = (_HALF_OVER_BETA * d) * d

        # classes (sublanes) -> per-sample, weight, then reduce across lanes
        per_sample = jnp.sum(l, axis=0, keepdims=True) * w            # (1, TB)
        out_ref[0, 0] = jnp.sum(per_sample)

    return kernel


def _round_up(x, m):
    return (x + m - 1) // m * m


def cb_loss(preds, truth, samples_per_cls, no_of_classes, beta, *, tile_b=8192):
    """Class-balanced smooth-L1-on-softmax loss (loss_type='mse'). Scalar f32."""
    # ---- class weights: tiny host-side setup mirroring the PyTorch numpy code
    samples_per_cls = np.asarray(samples_per_cls, dtype=np.float64)
    effective_num = 1.0 - np.power(beta, samples_per_cls)
    weights = (1.0 - beta) / effective_num
    weights = weights / np.sum(weights) * no_of_classes
    cw = jnp.asarray(weights, dtype=jnp.float32).reshape(no_of_classes, 1)

    B, C = preds.shape
    assert C == no_of_classes

    # ---- batch tiling -------------------------------------------------------
    if B <= 128:
        # single full-extent block: every block dim equals the full array dim
        tb = B
    else:
        target = max(128, _round_up(int(tile_b), 128))
        # keep >= 2 tiles when possible (both v7x TensorCores busy) and pick
        # tb ~ B / n_tiles so the ragged overhang of the last tile stays small
        n_tiles = max(2, pl.cdiv(B, target))
        tb = max(128, _round_up(pl.cdiv(B, n_tiles), 128))
    num_tiles = pl.cdiv(B, tb)

    # labels as a lane-dense (1, B) row: a free row-major reshape, no transpose
    truth2d = truth.reshape(1, B).astype(jnp.int32)

    kernel = _make_cb_loss_kernel(B, C)
    itemsize = jnp.dtype(preds.dtype).itemsize

    partials = pl.pallas_call(
        kernel,
        out_shape=jax.ShapeDtypeStruct((num_tiles, 1), jnp.float32),
        grid=(num_tiles,),
        in_specs=[
            pl.BlockSpec((tb, C), lambda i: (i, 0)),    # preds, natural layout
            pl.BlockSpec((1, tb), lambda i: (0, i)),    # truth, lane-dense
            pl.BlockSpec((C, 1), lambda i: (0, 0)),     # class weights (cached)
        ],
        out_specs=pl.BlockSpec((1, 1), lambda i: (i, 0),
                               memory_space=pltpu.MemorySpace.SMEM),
        compiler_params=pltpu.CompilerParams(
            dimension_semantics=("parallel",),          # v7x: 2 TCs split batch
            vmem_limit_bytes=48 * 1024 * 1024),
        cost_estimate=pl.CostEstimate(
            flops=int(B * C * (2 * C + 12)),
            transcendentals=int(B * C),
            bytes_accessed=int(B * (C * itemsize + 4)
                               + no_of_classes * 4 + num_tiles * 4)),
    )(preds, truth2d, cw)

    # tiny cross-tile reduction in the wrapper keeps the grid fully parallel
    return jnp.sum(partials)


def _reference(preds, truth, samples_per_cls, no_of_classes, beta):
    """Pure-JAX reference mirroring the PyTorch forward (loss_type='mse')."""
    samples_per_cls = np.asarray(samples_per_cls, dtype=np.float64)
    effective_num = 1.0 - np.power(beta, samples_per_cls)
    w = (1.0 - beta) / effective_num
    w = w / np.sum(w) * no_of_classes
    w = jnp.asarray(w, dtype=jnp.float32)

    one_hot = jax.nn.one_hot(truth, no_of_classes, dtype=jnp.float32)
    w_row = jnp.sum(one_hot * w[None, :], axis=1, keepdims=True)
    p = jax.nn.softmax(preds.astype(jnp.float32), axis=1)
    d = p - one_hot
    ad = jnp.abs(d)
    l = jnp.where(ad < SMOOTH_L1_BETA,
                  0.5 * d * d / SMOOTH_L1_BETA,
                  ad - 0.5 * SMOOTH_L1_BETA)
    return jnp.sum(l * w_row)


if __name__ == "__main__":
    key = jax.random.PRNGKey(0)
    C = 10
    beta = 0.9999
    gamma = 2.0  # unused for loss_type == 'mse' (matches the PyTorch forward)
    samples_per_cls = [50, 120, 30, 400, 75, 10, 220, 90, 5, 300]

    # Tolerance note: math is f32 throughout; the budget below leaves headroom
    # for MXU accumulation rounding in the in-kernel transpose and for sum
    # reordering, while still catching any real semantic error (>>0.2%).
    RTOL, ATOL = 2e-3, 1e-3

    k1, k2, k3, k4 = jax.random.split(key, 4)

    # --- small case: single full-extent block (no ragged lanes) ---
    B1 = 8
    preds1 = jax.random.normal(k1, (B1, C), dtype=jnp.float32)
    truth1 = jax.random.randint(k2, (B1,), 0, C, dtype=jnp.int32)
    loss1 = jax.block_until_ready(cb_loss(preds1, truth1, samples_per_cls, C, beta))
    ref1 = _reference(preds1, truth1, samples_per_cls, C, beta)
    np.testing.assert_allclose(np.asarray(loss1), np.asarray(ref1),
                               rtol=RTOL, atol=ATOL)

    # --- multi-tile case: grid of 3, ragged (masked) last tile ---
    B2 = 300
    preds2 = jax.random.normal(k3, (B2, C), dtype=jnp.float32)
    truth2 = jax.random.randint(k4, (B2,), 0, C, dtype=jnp.int32)
    loss2 = jax.block_until_ready(
        cb_loss(preds2, truth2, samples_per_cls, C, beta, tile_b=128))
    ref2 = _reference(preds2, truth2, samples_per_cls, C, beta)
    np.testing.assert_allclose(np.asarray(loss2), np.asarray(ref2),
                               rtol=RTOL, atol=ATOL)

    print("KERNEL_OK")
</pallas_src>

<mosaic_0001>
module attributes {stable_mosaic.version = 11 : i64} {
  func.func @kernel(%arg0: i32, %arg1: memref<8x10xf32, #tpu.memory_space<vmem>>, %arg2: memref<1x8xi32, #tpu.memory_space<vmem>>, %arg3: memref<10x1xf32, #tpu.memory_space<vmem>>, %arg4: memref<1x1xf32, #tpu.memory_space<smem>>) attributes {dimension_semantics = [#tpu.dimension_semantics<parallel>], iteration_bounds = array<i64: 1>, scalar_prefetch = 0 : i64, scratch_operands = 0 : i64, tpu.core_type = #tpu.core_type<tc>, window_params = [{transform_indices = @transform_0, window_bounds = array<i64: 8, 10>}, {transform_indices = @transform_1, window_bounds = array<i64: 1, 8>}, {pipeline_mode = #tpu.pipeline_mode<synchronous>, transform_indices = @transform_2, window_bounds = array<i64: 10, 1>}, {transform_indices = @transform_3, window_bounds = array<i64: 1, 1>}]} {
    %c8_i32 = arith.constant 8 : i32
    %0 = arith.muli %arg0, %c8_i32 : i32
    %1 = tpu.iota {dimensions = array<i32: 1>} : vector<1x8xi32>
    %2 = vector.broadcast %0 : i32 to vector<1x8xi32>
    %3 = arith.addi %2, %1 : vector<1x8xi32>
    %c8_i32_0 = arith.constant 8 : i32
    %4 = vector.broadcast %c8_i32_0 : i32 to vector<1x8xi32>
    %5 = arith.cmpi slt, %3, %4 : vector<1x8xi32>
    %6 = tpu.iota {dimensions = array<i32: 0>} : vector<10x10xi32>
    %7 = tpu.iota {dimensions = array<i32: 1>} : vector<10x10xi32>
    %8 = arith.cmpi eq, %6, %7 : vector<10x10xi32>
    %9 = arith.extui %8 : vector<10x10xi1> to vector<10x10xi32>
    %10 = arith.sitofp %9 : vector<10x10xi32> to vector<10x10xf32>
    %c0 = arith.constant 0 : index
    %c0_1 = arith.constant 0 : index
    %11 = vector.load %arg1[%c0, %c0_1] : memref<8x10xf32, #tpu.memory_space<vmem>>, vector<8x10xf32>
    %cst = arith.constant dense<0.000000e+00> : vector<10x8xf32>
    %12 = tpu.matmul %10, %11, %cst {dimension_numbers = #tpu.dot_dimension_numbers<[1], [1], [0], [0], [0, 0, 1, 0], [], []>, precision = #tpu.contract_precision<fp32>} : vector<10x10xf32>, vector<8x10xf32>, vector<10x8xf32> -> vector<10x8xf32>
    %cst_2 = arith.constant 0.000000e+00 : f32
    %13 = vector.shape_cast %5 : vector<1x8xi1> to vector<1x8xi1>
    %14 = vector.broadcast %13 : vector<1x8xi1> to vector<10x8xi1>
    %15 = vector.broadcast %cst_2 : f32 to vector<10x8xf32>
    %16 = arith.select %14, %12, %15 : vector<10x8xi1>, vector<10x8xf32>
    %cst_3 = arith.constant dense<0xFF800000> : vector<8xf32>
    %17 = vector.multi_reduction <maximumf>, %16, %cst_3 [0] : vector<10x8xf32> to vector<8xf32>
    %18 = vector.shape_cast %17 : vector<8xf32> to vector<1x8xf32>
    %19 = vector.broadcast %18 : vector<1x8xf32> to vector<10x8xf32>
    %20 = arith.subf %16, %19 : vector<10x8xf32>
    %21 = math.exp %20 : vector<10x8xf32>
    %cst_4 = arith.constant dense<0.000000e+00> : vector<8xf32>
    %22 = vector.multi_reduction <add>, %21, %cst_4 [0] : vector<10x8xf32> to vector<8xf32>
    %23 = vector.shape_cast %22 : vector<8xf32> to vector<1x8xf32>
    %24 = tpu.reciprocal %23 : vector<1x8xf32> -> vector<1x8xf32>
    %25 = vector.broadcast %24 : vector<1x8xf32> to vector<10x8xf32>
    %26 = arith.mulf %21, %25 : vector<10x8xf32>
    %c0_5 = arith.constant 0 : index
    %c0_6 = arith.constant 0 : index
    %27 = vector.load %arg2[%c0_5, %c0_6] : memref<1x8xi32, #tpu.memory_space<vmem>>, vector<1x8xi32>
    %c-1_i32 = arith.constant -1 : i32
    %28 = vector.broadcast %c-1_i32 : i32 to vector<1x8xi32>
    %29 = arith.select %5, %27, %28 : vector<1x8xi1>, vector<1x8xi32>
    %30 = tpu.iota {dimensions = array<i32: 0>} : vector<10x1xi32>
    %31 = vector.broadcast %30 : vector<10x1xi32> to vector<10x8xi32>
    %32 = vector.broadcast %29 : vector<1x8xi32> to vector<10x8xi32>
    %33 = arith.cmpi eq, %31, %32 : vector<10x8xi32>
    %c0_7 = arith.constant 0 : index
    %c0_8 = arith.constant 0 : index
    %34 = vector.load %arg3[%c0_7, %c0_8] : memref<10x1xf32, #tpu.memory_space<vmem>>, vector<10x1xf32>
    %cst_9 = arith.constant 0.000000e+00 : f32
    %35 = vector.shape_cast %34 : vector<10x1xf32> to vector<10x1xf32>
    %36 = vector.broadcast %35 : vector<10x1xf32> to vector<10x8xf32>
    %37 = vector.broadcast %cst_9 : f32 to vector<10x8xf32>
    %38 = arith.select %33, %36, %37 : vector<10x8xi1>, vector<10x8xf32>
    %cst_10 = arith.constant dense<0.000000e+00> : vector<8xf32>
    %39 = vector.multi_reduction <add>, %38, %cst_10 [0] : vector<10x8xf32> to vector<8xf32>
    %40 = vector.shape_cast %39 : vector<8xf32> to vector<1x8xf32>
    %cst_11 = arith.constant 1.000000e+00 : f32
    %41 = vector.broadcast %cst_11 : f32 to vector<10x8xf32>
    %42 = arith.subf %26, %41 : vector<10x8xf32>
    %43 = arith.select %33, %42, %26 : vector<10x8xi1>, vector<10x8xf32>
    %cst_12 = arith.constant 4.000000e-01 : f32
    %44 = vector.broadcast %cst_12 : f32 to vector<10x8xf32>
    %45 = arith.mulf %44, %43 : vector<10x8xf32>
    %46 = arith.mulf %45, %43 : vector<10x8xf32>
    %cst_13 = arith.constant dense<0.000000e+00> : vector<8xf32>
    %47 = vector.multi_reduction <add>, %46, %cst_13 [0] : vector<10x8xf32> to vector<8xf32>
    %48 = vector.shape_cast %47 : vector<8xf32> to vector<1x8xf32>
    %49 = arith.mulf %48, %40 : vector<1x8xf32>
    %50 = vector.shape_cast %49 : vector<1x8xf32> to vector<1x1x8xf32>
    %cst_14 = arith.constant dense<0.000000e+00> : vector<1xf32>
    %51 = vector.multi_reduction <add>, %50, %cst_14 [1, 2] : vector<1x1x8xf32> to vector<1xf32>
    %52 = vector.shape_cast %51 : vector<1xf32> to vector<1x1x1xf32>
    %53 = vector.extract %52[0, 0, 0] : f32 from vector<1x1x1xf32>
    %c0_15 = arith.constant 0 : index
    %c0_16 = arith.constant 0 : index
    %54 = memref.load %arg4[%c0_15, %c0_16] : memref<1x1xf32, #tpu.memory_space<smem>>
    memref.store %53, %arg4[%c0_15, %c0_16] : memref<1x1xf32, #tpu.memory_space<smem>>
    return
  }
  func.func @transform_0(%arg0: i32) -> (i32, i32) {
    %c0_i32 = arith.constant 0 : i32
    %c0_i32_0 = arith.constant 0 : i32
    return %arg0, %c0_i32 : i32, i32
  }
  func.func @transform_1(%arg0: i32) -> (i32, i32) {
    %c0_i32 = arith.constant 0 : i32
    %c0_i32_0 = arith.constant 0 : i32
    return %c0_i32, %arg0 : i32, i32
  }
  func.func @transform_2(%arg0: i32) -> (i32, i32) {
    %c0_i32 = arith.constant 0 : i32
    %c0_i32_0 = arith.constant 0 : i32
    %c0_i32_1 = arith.constant 0 : i32
    return %c0_i32, %c0_i32_0 : i32, i32
  }
  func.func @transform_3(%arg0: i32) -> (i32, i32) {
    %c0_i32 = arith.constant 0 : i32
    %c0_i32_0 = arith.constant 0 : i32
    return %arg0, %c0_i32 : i32, i32
  }
}

</mosaic_0001>

<llo_original>
// kernel: tpu_custom_call.1
$region0: #{tpu_custom_call.1}
  #allocation0 [shape = 'u32[]', space=smem, size = 0x4, offset = 0x4, fixed_abs, tag = 'smem constant byte address 0x4 - core index']
  #allocation1 [shape = 'u32[144,128]{1,0:T(1,128)}', space=vmem, size = 0x12000, scoped, tag = 'internal scratch']
  %s0 = inlined_call_operand.vmem [shape: f32[8,10], index: 0, kind: input, shape index: {}]
  %s1 = inlined_call_operand.vmem [shape: s32[1,8], index: 1, kind: input, shape index: {}]
  %s2 = inlined_call_operand.vmem [shape: f32[10,1], index: 2, kind: input, shape index: {}]
  %s3 = inlined_call_operand.hbm [shape: f32[1,1], index: 3, kind: output, shape index: {}]
  %s4 = sld [smem:[#allocation0]]
  $region22: #{tpu_custom_call.1} parent=0
    _
  %s6 = ssub.s32 1, %s4
  %s7 = scalar_select 0, %s6, %s4
  $region1: #{tpu_custom_call.1} parent=0
    #allocation2 [shape = 'u8[512]{0}', space=smem, size = 0x200, scoped, tag = 'output window, operand 0, single buffered']
    #allocation3 [shape = 's32[1]{0}', space=sflag, size = 0x4, scoped, tag = 'scoped memory for tpu_custom_call.1']
    %8 = vsyncpa [#allocation3], 0
    // Predicated region
    $region2: #{tpu_custom_call.1} parent=1 // pred_check
      _
    $region3: #{tpu_custom_call.1} parent=1 // pred_check_branch
      %10 = sbr.rel (0) target = $region5
    $region4: #{tpu_custom_call.1} parent=1 // pred_region
      _
    $region5: #{tpu_custom_call.1} parent=1 // pred_fallthru
      _
    // Predicated region
    $region6: #{tpu_custom_call.1} parent=1 // pred_check
      _
    $region7: #{tpu_custom_call.1} parent=1 // pred_check_branch
      %12 = sbr.rel (0) target = $region9
    $region8: #{tpu_custom_call.1} parent=1 // pred_region
      _
    $region9: #{tpu_custom_call.1} parent=1 // pred_fallthru
      _
    // Predicated region
    $region10: #{tpu_custom_call.1} parent=1 // pred_check
      _
    $region11: #{tpu_custom_call.1} parent=1 // pred_check_branch
      %14 = sbr.rel (0) target = $region13
    $region12: #{tpu_custom_call.1} parent=1 // pred_region
      _
    $region13: #{tpu_custom_call.1} parent=1 // pred_fallthru
      _
    %s15 = smul.u32 0, 8
    %v16 = vlaneseq
    %v17 = vand.u32 %v16, 127
    %v18 = vstv %s15
    %v19 = vadd.s32 %v18, %v17
    %vm20 = vcmp.lt.s32.totalorder %v19, 8
    %v21 = vlaneseq
    %v22 = vshrl.u32 %v21, 7
    %v23 = vadd.s32 %v22, 8
    %vm24 = vcmp.eq.s32.totalorder %v22, %v17
    %vm25 = vcmp.eq.s32.totalorder %v23, %v17
    %v26 = vsel %vm24, 1, 0
    %v27 = vsel %vm25, 1, 0
    %v28 = vcvt.s32.f32 %v26
    %v29 = vcvt.s32.f32 %v27
    %v30 = vld [vmem:[%s0] sm:$0xff]
    %vm31 = vcmask 80896
    %v33 = vsel %vm31, %v28, 0
    %v36 = vsel %vm31, %v29, 0
    %v39 = vsel %vm31, %v30, 0
    %41 = vmatprep.subr.mxu0 0.0
    %v42 = vand.u32 %v39, 4294901760
    %43 = vmatpush1.xpose.msra.mxu0 %v42
    %44 = vmatprep.subr.mxu0 0.0
    %45 = vmatpush1.xpose.msra.mxu0 0.0
    %46 = vmatprep.subr.mxu0 0.0
    %47 = vmatpush1.xpose.msra.mxu0 0.0
    %48 = vmatprep.subr.mxu0 0.0
    %49 = vmatpush1.xpose.msra.mxu0 0.0
    %50 = vmatprep.subr.mxu0 0.0
    %51 = vmatpush1.xpose.msra.mxu0 0.0
    %52 = vmatprep.subr.mxu0 0.0
    %53 = vmatpush1.xpose.msra.mxu0 0.0
    %54 = vmatprep.subr.mxu0 0.0
    %55 = vmatpush1.xpose.msra.mxu0 0.0
    %56 = vmatprep.subr.mxu0 0.0
    %57 = vmatpush1.xpose.msra.mxu0 0.0
    %58 = vmatprep.subr.mxu0 0.0
    %59 = vmatpush1.xpose.msra.mxu0 0.0
    %60 = vmatprep.subr.mxu0 0.0
    %61 = vmatpush1.xpose.msra.mxu0 0.0
    %62 = vmatprep.subr.mxu0 0.0
    %63 = vmatpush1.xpose.msra.mxu0 0.0
    %64 = vmatprep.subr.mxu0 0.0
    %65 = vmatpush1.xpose.msra.mxu0 0.0
    %66 = vmatprep.subr.mxu0 0.0
    %67 = vmatpush1.xpose.msra.mxu0 0.0
    %68 = vmatprep.subr.mxu0 0.0
    %69 = vmatpush1.xpose.msra.mxu0 0.0
    %70 = vmatprep.subr.mxu0 0.0
    %71 = vmatpush1.xpose.msra.mxu0 0.0
    %72 = vmatprep.subr.mxu0 0.0
    %73 = vmatpush1.xpose.msra.mxu0 0.0
    %74 = vmatprep.subr.mxu0 0.0
    %75 = vmatpush1.xpose.msra.mxu0 0.0
    %76 = vmatprep.subr.mxu0 0.0
    %77 = vmatpush1.xpose.msra.mxu0 0.0
    %78 = vmatprep.subr.mxu0 0.0
    %79 = vmatpush1.xpose.msra.mxu0 0.0
    %80 = vmatprep.subr.mxu0 0.0
    %81 = vmatpush1.xpose.msra.mxu0 0.0
    %82 = vmatprep.subr.mxu0 0.0
    %83 = vmatpush1.xpose.msra.mxu0 0.0
    %84 = vmatprep.subr.mxu0 0.0
    %85 = vmatpush1.xpose.msra.mxu0 0.0
    %86 = vmatprep.subr.mxu0 0.0
    %87 = vmatpush1.xpose.msra.mxu0 0.0
    %88 = vmatprep.subr.mxu0 0.0
    %89 = vmatpush1.xpose.msra.mxu0 0.0
    %90 = vmatprep.subr.mxu0 0.0
    %91 = vmatpush1.xpose.msra.mxu0 0.0
    %92 = vmatprep.subr.mxu0 0.0
    %93 = vmatpush1.xpose.msra.mxu0 0.0
    %94 = vmatprep.subr.mxu0 0.0
    %95 = vmatpush1.xpose.msra.mxu0 0.0
    %96 = vmatprep.subr.mxu0 0.0
    %97 = vmatpush1.xpose.msra.mxu0 0.0
    %98 = vmatprep.subr.mxu0 0.0
    %99 = vmatpush1.xpose.msra.mxu0 0.0
    %100 = vmatprep.subr.mxu0 0.0
    %101 = vmatpush1.xpose.msra.mxu0 0.0
    %102 = vmatprep.subr.mxu0 0.0
    %103 = vmatpush1.xpose.msra.mxu0 0.0
    %104 = vmatprep.subr.mxu0 0.0
    %105 = vmatpush1.xpose.msra.mxu0 0.0
    %106 = vmatprep.mubr.f32.mxu0 0.0
    %v107 = vand.u32 %v33, 4294901760
    %v108 = vsub.f32 %v33, %v107
    %v109 = vand.u32 %v108, 4294901760
    %v110 = vsub.f32 %v108, %v109
    %v111 = vand.u32 %v110, 4294901760
    %112 = vmatmul.mubr.f32.gmra.mrb[0].mxu0 %v111
    %v113 = vpop.f32.mrb[0].mxu0
    %v114 = vadd.f32 0.0, %v113
    %v115 = vpop.f32.mrb[0].mxu0
    %116 = vmatprep.mubr.f32.mxu0 0.0
    %v117 = vand.u32 %v36, 4294901760
    %v118 = vsub.f32 %v36, %v117
    %v119 = vand.u32 %v118, 4294901760
    %v120 = vsub.f32 %v118, %v119
    %v121 = vand.u32 %v120, 4294901760
    %122 = vmatmul.mubr.f32.gmra.mrb[0].mxu0 %v121
    %v123 = vpop.f32.mrb[0].mxu0
    %v124 = vadd.f32 0.0, %v123
    %v125 = vpop.f32.mrb[0].mxu0
    %126 = vdwg.mxu0
    %127 = vmatprep.subr.mxu0 0.0
    %v128 = vand.u32 %v39, 4294901760
    %v129 = vsub.f32 %v39, %v128
    %v130 = vand.u32 %v129, 4294901760
    %v131 = vsub.f32 %v129, %v130
    %v132 = vand.u32 %v131, 4294901760
    %133 = vmatpush1.xpose.msra.mxu0 %v132
    %134 = vmatprep.subr.mxu0 0.0
    %135 = vmatpush1.xpose.msra.mxu0 0.0
    %136 = vmatprep.subr.mxu0 0.0
    %137 = vmatpush1.xpose.msra.mxu0 0.0
    %138 = vmatprep.subr.mxu0 0.0
    %139 = vmatpush1.xpose.msra.mxu0 0.0
    %140 = vmatprep.subr.mxu0 0.0
    %141 = vmatpush1.xpose.msra.mxu0 0.0
    %142 = vmatprep.subr.mxu0 0.0
    %143 = vmatpush1.xpose.msra.mxu0 0.0
    %144 = vmatprep.subr.mxu0 0.0
    %145 = vmatpush1.xpose.msra.mxu0 0.0
    %146 = vmatprep.subr.mxu0 0.0
    %147 = vmatpush1.xpose.msra.mxu0 0.0
    %148 = vmatprep.subr.mxu0 0.0
    %149 = vmatpush1.xpose.msra.mxu0 0.0
    %150 = vmatprep.subr.mxu0 0.0
    %151 = vmatpush1.xpose.msra.mxu0 0.0
    %152 = vmatprep.subr.mxu0 0.0
    %153 = vmatpush1.xpose.msra.mxu0 0.0
    %154 = vmatprep.subr.mxu0 0.0
    %155 = vmatpush1.xpose.msra.mxu0 0.0
    %156 = vmatprep.subr.mxu0 0.0
    %157 = vmatpush1.xpose.msra.mxu0 0.0
    %158 = vmatprep.subr.mxu0 0.0
    %159 = vmatpush1.xpose.msra.mxu0 0.0
    %160 = vmatprep.subr.mxu0 0.0
    %161 = vmatpush1.xpose.msra.mxu0 0.0
    %162 = vmatprep.subr.mxu0 0.0
    %163 = vmatpush1.xpose.msra.mxu0 0.0
    %164 = vmatprep.subr.mxu0 0.0
    %165 = vmatpush1.xpose.msra.mxu0 0.0
    %166 = vmatprep.subr.mxu0 0.0
    %167 = vmatpush1.xpose.msra.mxu0 0.0
    %168 = vmatprep.subr.mxu0 0.0
    %169 = vmatpush1.xpose.msra.mxu0 0.0
    %170 = vmatprep.subr.mxu0 0.0
    %171 = vmatpush1.xpose.msra.mxu0 0.0
    %172 = vmatprep.subr.mxu0 0.0
    %173 = vmatpush1.xpose.msra.mxu0 0.0
    %174 = vmatprep.subr.mxu0 0.0
    %175 = vmatpush1.xpose.msra.mxu0 0.0
    %176 = vmatprep.subr.mxu0 0.0
    %177 = vmatpush1.xpose.msra.mxu0 0.0
    %178 = vmatprep.subr.mxu0 0.0
    %179 = vmatpush1.xpose.msra.mxu0 0.0
    %180 = vmatprep.subr.mxu0 0.0
    %181 = vmatpush1.xpose.msra.mxu0 0.0
    %182 = vmatprep.subr.mxu0 0.0
    %183 = vmatpush1.xpose.msra.mxu0 0.0
    %184 = vmatprep.subr.mxu0 0.0
    %185 = vmatpush1.xpose.msra.mxu0 0.0
    %186 = vmatprep.subr.mxu0 0.0
    %187 = vmatpush1.xpose.msra.mxu0 0.0
    %188 = vmatprep.subr.mxu0 0.0
    %189 = vmatpush1.xpose.msra.mxu0 0.0
    %190 = vmatprep.subr.mxu0 0.0
    %191 = vmatpush1.xpose.msra.mxu0 0.0
    %192 = vmatprep.subr.mxu0 0.0
    %193 = vmatpush1.xpose.msra.mxu0 0.0
    %194 = vmatprep.subr.mxu0 0.0
    %195 = vmatpush1.xpose.msra.mxu0 0.0
    %196 = vmatprep.mubr.f32.mxu0 0.0
    %v197 = vand.u32 %v33, 4294901760
    %198 = vmatmul.mubr.f32.gmra.mrb[0].mxu0 %v197
    %v199 = vpop.f32.mrb[0].mxu0
    %v200 = vadd.f32 %v114, %v199
    %v201 = vpop.f32.mrb[0].mxu0
    %202 = vmatprep.mubr.f32.mxu0 0.0
    %v203 = vand.u32 %v36, 4294901760
    %204 = vmatmul.mubr.f32.gmra.mrb[0].mxu0 %v203
    %v205 = vpop.f32.mrb[0].mxu0
    %v206 = vadd.f32 %v124, %v205
    %v207 = vpop.f32.mrb[0].mxu0
    %208 = vdwg.mxu0
    %209 = vmatprep.subr.mxu0 0.0
    %v210 = vand.u32 %v39, 4294901760
    %v211 = vsub.f32 %v39, %v210
    %212 = vmatpush1.xpose.msra.mxu0 %v211
    %213 = vmatprep.subr.mxu0 0.0
    %214 = vmatpush1.xpose.msra.mxu0 0.0
    %215 = vmatprep.subr.mxu0 0.0
    %216 = vmatpush1.xpose.msra.mxu0 0.0
    %217 = vmatprep.subr.mxu0 0.0
    %218 = vmatpush1.xpose.msra.mxu0 0.0
    %219 = vmatprep.subr.mxu0 0.0
    %220 = vmatpush1.xpose.msra.mxu0 0.0
    %221 = vmatprep.subr.mxu0 0.0
    %222 = vmatpush1.xpose.msra.mxu0 0.0
    %223 = vmatprep.subr.mxu0 0.0
    %224 = vmatpush1.xpose.msra.mxu0 0.0
    %225 = vmatprep.subr.mxu0 0.0
    %226 = vmatpush1.xpose.msra.mxu0 0.0
    %227 = vmatprep.subr.mxu0 0.0
    %228 = vmatpush1.xpose.msra.mxu0 0.0
    %229 = vmatprep.subr.mxu0 0.0
    %230 = vmatpush1.xpose.msra.mxu0 0.0
    %231 = vmatprep.subr.mxu0 0.0
    %232 = vmatpush1.xpose.msra.mxu0 0.0
    %233 = vmatprep.subr.mxu0 0.0
    %234 = vmatpush1.xpose.msra.mxu0 0.0
    %235 = vmatprep.subr.mxu0 0.0
    %236 = vmatpush1.xpose.msra.mxu0 0.0
    %237 = vmatprep.subr.mxu0 0.0
    %238 = vmatpush1.xpose.msra.mxu0 0.0
    %239 = vmatprep.subr.mxu0 0.0
    %240 = vmatpush1.xpose.msra.mxu0 0.0
    %241 = vmatprep.subr.mxu0 0.0
    %242 = vmatpush1.xpose.msra.mxu0 0.0
    %243 = vmatprep.subr.mxu0 0.0
    %244 = vmatpush1.xpose.msra.mxu0 0.0
    %245 = vmatprep.subr.mxu0 0.0
    %246 = vmatpush1.xpose.msra.mxu0 0.0
    %247 = vmatprep.subr.mxu0 0.0
    %248 = vmatpush1.xpose.msra.mxu0 0.0
    %249 = vmatprep.subr.mxu0 0.0
    %250 = vmatpush1.xpose.msra.mxu0 0.0
    %251 = vmatprep.subr.mxu0 0.0
    %252 = vmatpush1.xpose.msra.mxu0 0.0
    %253 = vmatprep.subr.mxu0 0.0
    %254 = vmatpush1.xpose.msra.mxu0 0.0
    %255 = vmatprep.subr.mxu0 0.0
    %256 = vmatpush1.xpose.msra.mxu0 0.0
    %257 = vmatprep.subr.mxu0 0.0
    %258 = vmatpush1.xpose.msra.mxu0 0.0
    %259 = vmatprep.subr.mxu0 0.0
    %260 = vmatpush1.xpose.msra.mxu0 0.0
    %261 = vmatprep.subr.mxu0 0.0
    %262 = vmatpush1.xpose.msra.mxu0 0.0
    %263 = vmatprep.subr.mxu0 0.0
    %264 = vmatpush1.xpose.msra.mxu0 0.0
    %265 = vmatprep.subr.mxu0 0.0
    %266 = vmatpush1.xpose.msra.mxu0 0.0
    %267 = vmatprep.subr.mxu0 0.0
    %268 = vmatpush1.xpose.msra.mxu0 0.0
    %269 = vmatprep.subr.mxu0 0.0
    %270 = vmatpush1.xpose.msra.mxu0 0.0
    %271 = vmatprep.subr.mxu0 0.0
    %272 = vmatpush1.xpose.msra.mxu0 0.0
    %273 = vmatprep.subr.mxu0 0.0
    %274 = vmatpush1.xpose.msra.mxu0 0.0
    %275 = vmatprep.mubr.f32.mxu0 0.0
    %v276 = vand.u32 %v33, 4294901760
    %v277 = vsub.f32 %v33, %v276
    %278 = vmatmul.mubr.f32.gmra.mrb[0].mxu0 %v277
    %v279 = vpop.f32.mrb[0].mxu0
    %v280 = vadd.f32 %v200, %v279
    %v281 = vpop.f32.mrb[0].mxu0
    %282 = vmatprep.mubr.f32.mxu0 0.0
    %v283 = vand.u32 %v36, 4294901760
    %v284 = vsub.f32 %v36, %v283
    %285 = vmatmul.mubr.f32.gmra.mrb[0].mxu0 %v284
    %v286 = vpop.f32.mrb[0].mxu0
    %v287 = vadd.f32 %v206, %v286
    %v288 = vpop.f32.mrb[0].mxu0
    %289 = vdwg.mxu0
    %290 = vmatprep.subr.mxu0 0.0
    %v291 = vand.u32 %v39, 4294901760
    %292 = vmatpush1.xpose.msra.mxu0 %v291
    %293 = vmatprep.subr.mxu0 0.0
    %294 = vmatpush1.xpose.msra.mxu0 0.0
    %295 = vmatprep.subr.mxu0 0.0
    %296 = vmatpush1.xpose.msra.mxu0 0.0
    %297 = vmatprep.subr.mxu0 0.0
    %298 = vmatpush1.xpose.msra.mxu0 0.0
    %299 = vmatprep.subr.mxu0 0.0
    %300 = vmatpush1.xpose.msra.mxu0 0.0
    %301 = vmatprep.subr.mxu0 0.0
    %302 = vmatpush1.xpose.msra.mxu0 0.0
    %303 = vmatprep.subr.mxu0 0.0
    %304 = vmatpush1.xpose.msra.mxu0 0.0
    %305 = vmatprep.subr.mxu0 0.0
    %306 = vmatpush1.xpose.msra.mxu0 0.0
    %307 = vmatprep.subr.mxu0 0.0
    %308 = vmatpush1.xpose.msra.mxu0 0.0
    %309 = vmatprep.subr.mxu0 0.0
    %310 = vmatpush1.xpose.msra.mxu0 0.0
    %311 = vmatprep.subr.mxu0 0.0
    %312 = vmatpush1.xpose.msra.mxu0 0.0
    %313 = vmatprep.subr.mxu0 0.0
    %314 = vmatpush1.xpose.msra.mxu0 0.0
    %315 = vmatprep.subr.mxu0 0.0
    %316 = vmatpush1.xpose.msra.mxu0 0.0
    %317 = vmatprep.subr.mxu0 0.0
    %318 = vmatpush1.xpose.msra.mxu0 0.0
    %319 = vmatprep.subr.mxu0 0.0
    %320 = vmatpush1.xpose.msra.mxu0 0.0
    %321 = vmatprep.subr.mxu0 0.0
    %322 = vmatpush1.xpose.msra.mxu0 0.0
    %323 = vmatprep.subr.mxu0 0.0
    %324 = vmatpush1.xpose.msra.mxu0 0.0
    %325 = vmatprep.subr.mxu0 0.0
    %326 = vmatpush1.xpose.msra.mxu0 0.0
    %327 = vmatprep.subr.mxu0 0.0
    %328 = vmatpush1.xpose.msra.mxu0 0.0
    %329 = vmatprep.subr.mxu0 0.0
    %330 = vmatpush1.xpose.msra.mxu0 0.0
    %331 = vmatprep.subr.mxu0 0.0
    %332 = vmatpush1.xpose.msra.mxu0 0.0
    %333 = vmatprep.subr.mxu0 0.0
    %334 = vmatpush1.xpose.msra.mxu0 0.0
    %335 = vmatprep.subr.mxu0 0.0
    %336 = vmatpush1.xpose.msra.mxu0 0.0
    %337 = vmatprep.subr.mxu0 0.0
    %338 = vmatpush1.xpose.msra.mxu0 0.0
    %339 = vmatprep.subr.mxu0 0.0
    %340 = vmatpush1.xpose.msra.mxu0 0.0
    %341 = vmatprep.subr.mxu0 0.0
    %342 = vmatpush1.xpose.msra.mxu0 0.0
    %343 = vmatprep.subr.mxu0 0.0
    %344 = vmatpush1.xpose.msra.mxu0 0.0
    %345 = vmatprep.subr.mxu0 0.0
    %346 = vmatpush1.xpose.msra.mxu0 0.0
    %347 = vmatprep.subr.mxu0 0.0
    %348 = vmatpush1.xpose.msra.mxu0 0.0
    %349 = vmatprep.subr.mxu0 0.0
    %350 = vmatpush1.xpose.msra.mxu0 0.0
    %351 = vmatprep.subr.mxu0 0.0
    %352 = vmatpush1.xpose.msra.mxu0 0.0
    %353 = vmatprep.subr.mxu0 0.0
    %354 = vmatpush1.xpose.msra.mxu0 0.0
    %355 = vmatprep.mubr.f32.mxu0 0.0
    %v356 = vand.u32 %v33, 4294901760
    %v357 = vsub.f32 %v33, %v356
    %v358 = vand.u32 %v357, 4294901760
    %359 = vmatmul.mubr.f32.gmra.mrb[0].mxu0 %v358
    %v360 = vpop.f32.mrb[0].mxu0
    %v361 = vadd.f32 %v280, %v360
    %v362 = vpop.f32.mrb[0].mxu0
    %363 = vmatprep.mubr.f32.mxu0 0.0
    %v364 = vand.u32 %v36, 4294901760
    %v365 = vsub.f32 %v36, %v364
    %v366 = vand.u32 %v365, 4294901760
    %367 = vmatmul.mubr.f32.gmra.mrb[0].mxu0 %v366
    %v368 = vpop.f32.mrb[0].mxu0
    %v369 = vadd.f32 %v287, %v368
    %v370 = vpop.f32.mrb[0].mxu0
    %371 = vdwg.mxu0
    %372 = vmatprep.subr.mxu0 0.0
    %v373 = vand.u32 %v39, 4294901760
    %v374 = vsub.f32 %v39, %v373
    %v375 = vand.u32 %v374, 4294901760
    %376 = vmatpush1.xpose.msra.mxu0 %v375
    %377 = vmatprep.subr.mxu0 0.0
    %378 = vmatpush1.xpose.msra.mxu0 0.0
    %379 = vmatprep.subr.mxu0 0.0
    %380 = vmatpush1.xpose.msra.mxu0 0.0
    %381 = vmatprep.subr.mxu0 0.0
    %382 = vmatpush1.xpose.msra.mxu0 0.0
    %383 = vmatprep.subr.mxu0 0.0
    %384 = vmatpush1.xpose.msra.mxu0 0.0
    %385 = vmatprep.subr.mxu0 0.0
    %386 = vmatpush1.xpose.msra.mxu0 0.0
    %387 = vmatprep.subr.mxu0 0.0
    %388 = vmatpush1.xpose.msra.mxu0 0.0
    %389 = vmatprep.subr.mxu0 0.0
    %390 = vmatpush1.xpose.msra.mxu0 0.0
    %391 = vmatprep.subr.mxu0 0.0
    %392 = vmatpush1.xpose.msra.mxu0 0.0
    %393 = vmatprep.subr.mxu0 0.0
    %394 = vmatpush1.xpose.msra.mxu0 0.0
    %395 = vmatprep.subr.mxu0 0.0
    %396 = vmatpush1.xpose.msra.mxu0 0.0
    %397 = vmatprep.subr.mxu0 0.0
    %398 = vmatpush1.xpose.msra.mxu0 0.0
    %399 = vmatprep.subr.mxu0 0.0
    %400 = vmatpush1.xpose.msra.mxu0 0.0
    %401 = vmatprep.subr.mxu0 0.0
    %402 = vmatpush1.xpose.msra.mxu0 0.0
    %403 = vmatprep.subr.mxu0 0.0
    %404 = vmatpush1.xpose.msra.mxu0 0.0
    %405 = vmatprep.subr.mxu0 0.0
    %406 = vmatpush1.xpose.msra.mxu0 0.0
    %407 = vmatprep.subr.mxu0 0.0
    %408 = vmatpush1.xpose.msra.mxu0 0.0
    %409 = vmatprep.subr.mxu0 0.0
    %410 = vmatpush1.xpose.msra.mxu0 0.0
    %411 = vmatprep.subr.mxu0 0.0
    %412 = vmatpush1.xpose.msra.mxu0 0.0
    %413 = vmatprep.subr.mxu0 0.0
    %414 = vmatpush1.xpose.msra.mxu0 0.0
    %415 = vmatprep.subr.mxu0 0.0
    %416 = vmatpush1.xpose.msra.mxu0 0.0
    %417 = vmatprep.subr.mxu0 0.0
    %418 = vmatpush1.xpose.msra.mxu0 0.0
    %419 = vmatprep.subr.mxu0 0.0
    %420 = vmatpush1.xpose.msra.mxu0 0.0
    %421 = vmatprep.subr.mxu0 0.0
    %422 = vmatpush1.xpose.msra.mxu0 0.0
    %423 = vmatprep.subr.mxu0 0.0
    %424 = vmatpush1.xpose.msra.mxu0 0.0
    %425 = vmatprep.subr.mxu0 0.0
    %426 = vmatpush1.xpose.msra.mxu0 0.0
    %427 = vmatprep.subr.mxu0 0.0
    %428 = vmatpush1.xpose.msra.mxu0 0.0
    %429 = vmatprep.subr.mxu0 0.0
    %430 = vmatpush1.xpose.msra.mxu0 0.0
    %431 = vmatprep.subr.mxu0 0.0
    %432 = vmatpush1.xpose.msra.mxu0 0.0
    %433 = vmatprep.subr.mxu0 0.0
    %434 = vmatpush1.xpose.msra.mxu0 0.0
    %435 = vmatprep.subr.mxu0 0.0
    %436 = vmatpush1.xpose.msra.mxu0 0.0
    %437 = vmatprep.subr.mxu0 0.0
    %438 = vmatpush1.xpose.msra.mxu0 0.0
    %439 = vmatprep.mubr.f32.mxu0 0.0
    %v440 = vand.u32 %v33, 4294901760
    %441 = vmatmul.mubr.f32.gmra.mrb[0].mxu0 %v440
    %v442 = vpop.f32.mrb[0].mxu0
    %v443 = vadd.f32 %v361, %v442
    %v444 = vpop.f32.mrb[0].mxu0
    %445 = vmatprep.mubr.f32.mxu0 0.0
    %v446 = vand.u32 %v36, 4294901760
    %447 = vmatmul.mubr.f32.gmra.mrb[0].mxu0 %v446
    %v448 = vpop.f32.mrb[0].mxu0
    %v449 = vadd.f32 %v369, %v448
    %v450 = vpop.f32.mrb[0].mxu0
    %451 = vdwg.mxu0
    %452 = vmatprep.subr.mxu0 0.0
    %v453 = vand.u32 %v39, 4294901760
    %454 = vmatpush1.xpose.msra.mxu0 %v453
    %455 = vmatprep.subr.mxu0 0.0
    %456 = vmatpush1.xpose.msra.mxu0 0.0
    %457 = vmatprep.subr.mxu0 0.0
    %458 = vmatpush1.xpose.msra.mxu0 0.0
    %459 = vmatprep.subr.mxu0 0.0
    %460 = vmatpush1.xpose.msra.mxu0 0.0
    %461 = vmatprep.subr.mxu0 0.0
    %462 = vmatpush1.xpose.msra.mxu0 0.0
    %463 = vmatprep.subr.mxu0 0.0
    %464 = vmatpush1.xpose.msra.mxu0 0.0
    %465 = vmatprep.subr.mxu0 0.0
    %466 = vmatpush1.xpose.msra.mxu0 0.0
    %467 = vmatprep.subr.mxu0 0.0
    %468 = vmatpush1.xpose.msra.mxu0 0.0
    %469 = vmatprep.subr.mxu0 0.0
    %470 = vmatpush1.xpose.msra.mxu0 0.0
    %471 = vmatprep.subr.mxu0 0.0
    %472 = vmatpush1.xpose.msra.mxu0 0.0
    %473 = vmatprep.subr.mxu0 0.0
    %474 = vmatpush1.xpose.msra.mxu0 0.0
    %475 = vmatprep.subr.mxu0 0.0
    %476 = vmatpush1.xpose.msra.mxu0 0.0
    %477 = vmatprep.subr.mxu0 0.0
    %478 = vmatpush1.xpose.msra.mxu0 0.0
    %479 = vmatprep.subr.mxu0 0.0
    %480 = vmatpush1.xpose.msra.mxu0 0.0
    %481 = vmatprep.subr.mxu0 0.0
    %482 = vmatpush1.xpose.msra.mxu0 0.0
    %483 = vmatprep.subr.mxu0 0.0
    %484 = vmatpush1.xpose.msra.mxu0 0.0
    %485 = vmatprep.subr.mxu0 0.0
    %486 = vmatpush1.xpose.msra.mxu0 0.0
    %487 = vmatprep.subr.mxu0 0.0
    %488 = vmatpush1.xpose.msra.mxu0 0.0
    %489 = vmatprep.subr.mxu0 0.0
    %490 = vmatpush1.xpose.msra.mxu0 0.0
    %491 = vmatprep.subr.mxu0 0.0
    %492 = vmatpush1.xpose.msra.mxu0 0.0
    %493 = vmatprep.subr.mxu0 0.0
    %494 = vmatpush1.xpose.msra.mxu0 0.0
    %495 = vmatprep.subr.mxu0 0.0
    %496 = vmatpush1.xpose.msra.mxu0 0.0
    %497 = vmatprep.subr.mxu0 0.0
    %498 = vmatpush1.xpose.msra.mxu0 0.0
    %499 = vmatprep.subr.mxu0 0.0
    %500 = vmatpush1.xpose.msra.mxu0 0.0
    %501 = vmatprep.subr.mxu0 0.0
    %502 = vmatpush1.xpose.msra.mxu0 0.0
    %503 = vmatprep.subr.mxu0 0.0
    %504 = vmatpush1.xpose.msra.mxu0 0.0
    %505 = vmatprep.subr.mxu0 0.0
    %506 = vmatpush1.xpose.msra.mxu0 0.0
    %507 = vmatprep.subr.mxu0 0.0
    %508 = vmatpush1.xpose.msra.mxu0 0.0
    %509 = vmatprep.subr.mxu0 0.0
    %510 = vmatpush1.xpose.msra.mxu0 0.0
    %511 = vmatprep.subr.mxu0 0.0
    %512 = vmatpush1.xpose.msra.mxu0 0.0
    %513 = vmatprep.subr.mxu0 0.0
    %514 = vmatpush1.xpose.msra.mxu0 0.0
    %515 = vmatprep.subr.mxu0 0.0
    %516 = vmatpush1.xpose.msra.mxu0 0.0
    %517 = vmatprep.mubr.f32.mxu0 0.0
    %v518 = vand.u32 %v33, 4294901760
    %519 = vmatmul.mubr.f32.gmra.mrb[0].mxu0 %v518
    %v520 = vpop.f32.mrb[0].mxu0
    %v521 = vadd.f32 %v443, %v520
    %v522 = vpop.f32.mrb[0].mxu0
    %523 = vmatprep.mubr.f32.mxu0 0.0
    %v524 = vand.u32 %v36, 4294901760
    %525 = vmatmul.mubr.f32.gmra.mrb[0].mxu0 %v524
    %v526 = vpop.f32.mrb[0].mxu0
    %v527 = vadd.f32 %v449, %v526
    %v528 = vpop.f32.mrb[0].mxu0
    %529 = vdwg.mxu0
    %v530 = vsel %vm20, 1, 0
    %vm531 = vcmp.eq.s32.totalorder %v530, 1
    %v532 = vsel %vm531, %v521, 0.0
    %v533 = vsel %vm531, %v527, 0.0
    %vm534 = vcmask 64512
    %v535 = vsel %vm534, %v532, -inf
    %vm536 = vcmask 58368
    %v537 = vsel %vm536, %v533, -inf
    %v538 = vmax.f32 %v535, %v537
    %v539 = vrot.slane %v538, 4
    %v540 = vmax.f32 %v538, %v539
    %v541 = vrot.slane %v540, 2
    %v542 = vmax.f32 %v540, %v541
    %v543 = vrot.slane %v542, 1
    %v544 = vmax.f32 %v542, %v543
    %v545 = vsub.f32 %v532, %v544
    %v546 = vsub.f32 %v533, %v544
    %v547 = vmul.f32 %v545, 1.442695
    %v548 = vpow.pop %v547
    %v549 = vmul.f32 %v546, 1.442695
    %v550 = vpow.pop %v549
    %v551 = vsel %vm534, %v548, 0.0
    %v552 = vsel %vm536, %v550, 0.0
    %v553 = vadd.f32 %v551, %v552
    %v554 = vrot.slane %v553, 4
    %v555 = vadd.f32 %v553, %v554
    %v556 = vrot.slane %v555, 2
    %v557 = vadd.f32 %v555, %v556
    %v558 = vrot.slane %v557, 1
    %v559 = vadd.f32 %v557, %v558
    %v560 = vrcp.pop %v559
    %v561 = vmul.f32 %v548, %v560
    %v562 = vmul.f32 %v550, %v560
    %v563 = vld [vmem:[%s1] sm:$0x1]
    %v564 = vsel %vm20, %v563, 4294967295
    %v565 = vlaneseq
    %v566 = vshrl.u32 %v565, 7
    %v567 = vsub.s32 0, %v566
    %v568 = vrot.slane %v564, %v567
    %vm569 = vcmp.eq.s32.totalorder %v22, %v568
    %vm570 = vcmp.eq.s32.totalorder %v23, %v568
    %v571 = vld [vmem:[%s2] sm:$0xff]
    %v572 = vld [vmem:[%s2 + $0x8] sm:$0x3]
    %574 = vset.pattern.permute.xlu0 0
    %575 = vperm.xlu0 %574, %v571
    %v576 = vpop.permute.xlu0 %575
    %579 = vset.pattern.permute.xlu0 0
    %580 = vperm.xlu0 %579, %v572
    %v581 = vpop.permute.xlu0 %580
    %v583 = vsel %vm569, %v576, 0.0
    %v584 = vsel %vm570, %v581, 0.0
    %v585 = vsel %vm534, %v583, 0.0
    %v586 = vsel %vm536, %v584, 0.0
    %v587 = vadd.f32 %v585, %v586
    %v588 = vrot.slane %v587, 4
    %v589 = vadd.f32 %v587, %v588
    %v590 = vrot.slane %v589, 2
    %v591 = vadd.f32 %v589, %v590
    %v592 = vrot.slane %v591, 1
    %v593 = vadd.f32 %v591, %v592
    %v594 = vsub.f32 %v561, 1.0
    %v595 = vsub.f32 %v562, 1.0
    %v596 = vsel %vm569, %v594, %v561
    %v597 = vsel %vm570, %v595, %v562
    %v598 = vmul.f32 %v596, 0.4
    %v599 = vmul.f32 %v597, 0.4
    %v600 = vmul.f32 %v598, %v596
    %v601 = vmul.f32 %v599, %v597
    %v602 = vsel %vm534, %v600, 0.0
    %v603 = vsel %vm536, %v601, 0.0
    %v604 = vadd.f32 %v602, %v603
    %v605 = vrot.slane %v604, 4
    %v606 = vadd.f32 %v604, %v605
    %v607 = vrot.slane %v606, 2
    %v608 = vadd.f32 %v606, %v607
    %v609 = vrot.slane %v608, 1
    %v610 = vadd.f32 %v608, %v609
    %v611 = vmul.f32 %v610, %v593
    %vm612 = vcmask 57344
    %v613 = vsel %vm612, %v611, 0.0
    %614 = vadd.xlane.f32.xlu0 %v613
    %v615 = vpop.xlane.xlu0 %614
    %v616 = vrot.slane %v615, 4
    %v617 = vadd.f32 %v615, %v616
    %v618 = vrot.slane %v617, 2
    %v619 = vadd.f32 %v617, %v618
    %v620 = vrot.slane %v619, 1
    %v621 = vadd.f32 %v619, %v620
    %s622 = vtos %v621
    %s623 = scalar_lea.smem [#allocation2], 0
    %624 = sst [smem:[%s623]] %s622
    // Predicated region
    $region14: #{tpu_custom_call.1} parent=1 // pred_check
      _
    $region15: #{tpu_custom_call.1} parent=1 // pred_check_branch
      %626 = sbr.rel (0) target = $region17
    $region16: #{tpu_custom_call.1} parent=1 // pred_region
      %s628 = ssub.s32 16, 16
      %629 = vsyncadd [#allocation3], %s628
      %632 = dma.smem_to_hbm [#allocation2], 16, %s3, [#allocation3]
    $region17: #{tpu_custom_call.1} parent=1 // pred_fallthru
      _
    // Predicated region
    $region18: #{tpu_custom_call.1} parent=1 // pred_check
      _
    $region19: #{tpu_custom_call.1} parent=1 // pred_check_branch
      %634 = sbr.rel (0) target = $region21
    $region20: #{tpu_custom_call.1} parent=1 // pred_region
      %635 = dma.done [#allocation3], 16
    $region21: #{tpu_custom_call.1} parent=1 // pred_fallthru
      _
    %636 = sfence
    %637 = vsyncpa [#allocation3], 1

</llo_original>
